<compile_context>
chip_gen: v6e
topology: v6e:2x2x1
jax: 0.10.0
libtpu: 0.0.40
codegen_flags: <defaults>
</compile_context>

<pallas_src>
import functools

import jax
import jax.numpy as jnp
from jax.experimental import pallas as pl
from jax.experimental.pallas import tpu as pltpu


def _cnn1d_kernel(x_ref, w_ref, b_ref, fcw_ref, fcb_ref, out_ref, *,
                  L, K, pad_left):
    # x_ref  : (Bt, L, E)     activation tile (f32 or bf16)
    # w_ref  : (K, E, F)      per-tap conv weights, bf16, resident
    # b_ref  : (1, F)         conv bias, f32, resident
    # fcw_ref: (F, O_pad)     fc weight (transposed, zero-padded lanes), bf16
    # fcb_ref: (1, O_pad)     fc bias (zero-padded), f32
    # out_ref: (Bt, O_pad)
    Bt = x_ref.shape[0]
    E = x_ref.shape[2]
    F = w_ref.shape[2]

    # Load the batch tile once; cast to bf16 for the MXU (accumulation is f32).
    x2d = x_ref[...].reshape(Bt * L, E).astype(jnp.bfloat16)

    # Conv1d('same') as K shifted rank-E matmuls:
    #   out[b, l, f] = sum_k sum_e x[b, l + k - pad_left, e] * w[k, e, f]
    # Each tap is one MXU dot over all rows; the (k - pad_left) shift is
    # applied to the F-wide product by zero-filling the rows that fall outside
    # the sequence (the 'same' halo) before accumulation.
    acc = None
    for k in range(K):                       # K is tiny and static -> unrolled
        s = k - pad_left
        prod = jnp.dot(x2d, w_ref[k], preferred_element_type=jnp.float32)
        prod = prod.reshape(Bt, L, F)
        if s > 0:
            prod = jnp.concatenate(
                [prod[:, s:, :], jnp.zeros((Bt, s, F), jnp.float32)], axis=1)
        elif s < 0:
            prod = jnp.concatenate(
                [jnp.zeros((Bt, -s, F), jnp.float32), prod[:, :L + s, :]],
                axis=1)
        acc = prod if acc is None else acc + prod       # (Bt, L, F) f32

    # AdaptiveMaxPool1d(1).  Bias-add and ReLU commute with max, so apply them
    # on the pooled (Bt, F) tensor instead of the (Bt, L, F) one.
    pooled = jnp.max(acc, axis=1) + b_ref[...]          # (Bt, F) f32
    pooled = jnp.maximum(pooled, 0.0)                   # ReLU

    out = jnp.dot(pooled.astype(jnp.bfloat16), fcw_ref[...],
                  preferred_element_type=jnp.float32) + fcb_ref[...]
    out_ref[...] = out.astype(out_ref.dtype)            # (Bt, O_pad)


def _pick_batch_tile(B, L, E, F, *, target_rows=2048,
                     vmem_budget_bytes=8 * 1024 * 1024):
    """Batch rows per grid step.

    * Bt*L ~ target_rows keeps DMA granularity / MXU M-dim large (per-step
      overhead ~0.35us; tiny tiles reach only ~30% of HBM roofline).
    * Per-step VMEM (2x double-buffered x tile + f32 conv intermediates) is
      kept under ~8 MiB, comfortably inside the 32 MiB scoped default and
      v7x's smaller 64 MiB physical VMEM.
    * Bt is a multiple of 8 whenever Bt < B so the (Bt, O_pad) output block
      obeys the (8, 128) rule (no masked partial stores); otherwise Bt == B.
    * When B is large we force >= 2 grid steps so ("parallel",) grid semantics
      can shard across both v7x TensorCores.
    """
    per_row_bytes = L * (2 * E * 4 + 3 * F * 4)
    cap = max(1, vmem_budget_bytes // max(per_row_bytes, 1))
    bt = max(1, min(target_rows // max(L, 1), cap))
    bt = max(8, (bt // 8) * 8)
    if bt >= B:
        if B >= 16:
            bt = max(8, ((B // 2) // 8) * 8)     # >= 2 grid steps (megacore)
        else:
            bt = B
    return bt


def cnn1d_forward(x, conv_w, conv_b, fc_w, fc_b):
    """x: (B, L, E) float32 (i.e. before the module's permute(0,2,1)).

    conv_w: (F, E, K)  (PyTorch Conv1d weight layout)
    conv_b: (F,)
    fc_w  : (O, F)     (PyTorch Linear weight layout)
    fc_b  : (O,)
    Returns (B, O) float32.
    """
    B, L, E = x.shape
    F, E_w, K = conv_w.shape
    assert E == E_w
    O = fc_w.shape[0]

    # padding='same' (stride=1): PyTorch pads (K-1)//2 left, rest right.
    pad_left = (K - 1) // 2

    # Per-tap conv weights (K, E, F), bf16 for the MXU.
    w_taps = jnp.transpose(conv_w, (2, 1, 0)).astype(jnp.bfloat16)
    b_1f = conv_b.reshape(1, F).astype(jnp.float32)

    # Lane-dense output: zero-pad O up to a multiple of 128 so the output
    # block is a full 128-lane unmasked store; slice the padding off outside.
    O_pad = pl.cdiv(O, 128) * 128
    fcw = jnp.zeros((F, O_pad), jnp.bfloat16).at[:, :O].set(
        fc_w.T.astype(jnp.bfloat16))                       # (F, O_pad)
    fcb = jnp.zeros((1, O_pad), jnp.float32).at[:, :O].set(
        fc_b.astype(jnp.float32))                          # (1, O_pad)

    Bt = _pick_batch_tile(B, L, E, F)
    grid = (pl.cdiv(B, Bt),)

    kernel = functools.partial(_cnn1d_kernel, L=L, K=K, pad_left=pad_left)

    cost = pl.CostEstimate(
        flops=2 * B * L * K * E * F + 2 * B * F * O_pad,
        transcendentals=0,
        bytes_accessed=int(x.size * x.dtype.itemsize
                           + 2 * (w_taps.size + fcw.size)
                           + 4 * (b_1f.size + fcb.size + B * O_pad)),
    )

    out_padded = pl.pallas_call(
        kernel,
        out_shape=jax.ShapeDtypeStruct((B, O_pad), jnp.float32),
        grid_spec=pltpu.PrefetchScalarGridSpec(
            num_scalar_prefetch=0,
            grid=grid,
            in_specs=[
                # TODO(synk): if profiling shows the activation DMA exposed,
                # add pipeline_mode=pl.Buffered(3) on this spec.
                pl.BlockSpec((Bt, L, E), lambda i: (i, 0, 0)),    # activations
                pl.BlockSpec((K, E, F), lambda i: (0, 0, 0)),     # conv W (resident)
                pl.BlockSpec((1, F), lambda i: (0, 0)),           # conv b (resident)
                pl.BlockSpec((F, O_pad), lambda i: (0, 0)),       # fc W   (resident)
                pl.BlockSpec((1, O_pad), lambda i: (0, 0)),       # fc b   (resident)
            ],
            out_specs=pl.BlockSpec((Bt, O_pad), lambda i: (i, 0)),
        ),
        compiler_params=pltpu.CompilerParams(
            dimension_semantics=("parallel",)),
        cost_estimate=cost,
    )(x, w_taps, b_1f, fcw, fcb)

    return out_padded[:, :O]


def _reference(x, conv_w, conv_b, fc_w, fc_b):
    # Pure-JAX f32 reference replicating the PyTorch forward.
    B, L, E = x.shape
    F, _, K = conv_w.shape
    pad_left = (K - 1) // 2
    pad_right = (K - 1) - pad_left
    x_pad = jnp.pad(x, ((0, 0), (pad_left, pad_right), (0, 0)))
    conv = jnp.zeros((B, L, F), jnp.float32)
    for k in range(K):
        conv = conv + jnp.einsum('ble,fe->blf', x_pad[:, k:k + L, :],
                                 conv_w[:, :, k])
    conv = conv + conv_b[None, None, :]
    conv = jnp.maximum(conv, 0.0)
    pooled = jnp.max(conv, axis=1)                       # (B, F)
    return pooled @ fc_w.T + fc_b[None, :]


if __name__ == "__main__":
    # Small shapes consistent with the module.
    B, L = 2, 16               # batch, sequence length
    E = 8                      # embedding_dim (in_channels)
    F = 16                     # num_filters
    K = 3                      # filter_size
    O = 4                      # output_dim

    key = jax.random.PRNGKey(0)
    kx, kw, kb, kfw, kfb = jax.random.split(key, 5)

    x = jax.random.normal(kx, (B, L, E), dtype=jnp.float32)
    conv_w = jax.random.normal(kw, (F, E, K), dtype=jnp.float32) * 0.1
    conv_b = jax.random.normal(kb, (F,), dtype=jnp.float32) * 0.1
    fc_w = jax.random.normal(kfw, (O, F), dtype=jnp.float32) * 0.1
    fc_b = jax.random.normal(kfb, (O,), dtype=jnp.float32) * 0.1

    out = cnn1d_forward(x, conv_w, conv_b, fc_w, fc_b)
    out = jax.block_until_ready(out)

    ref = _reference(x, conv_w, conv_b, fc_w, fc_b)
    assert out.shape == (B, O)
    # bf16 MXU operands (f32 accumulation) -> loosen tolerance accordingly.
    assert jnp.allclose(out, ref, atol=3e-2, rtol=3e-2), (out, ref)

    print("KERNEL_OK")
</pallas_src>

<mosaic_0001>
module attributes {stable_mosaic.version = 11 : i64} {
  func.func @_cnn1d_kernel(%arg0: i32, %arg1: memref<2x16x8xf32, #tpu.memory_space<vmem>>, %arg2: memref<3x8x16xbf16, #tpu.memory_space<vmem>>, %arg3: memref<1x16xf32, #tpu.memory_space<vmem>>, %arg4: memref<16x128xbf16, #tpu.memory_space<vmem>>, %arg5: memref<1x128xf32, #tpu.memory_space<vmem>>, %arg6: memref<2x128xf32, #tpu.memory_space<vmem>>) attributes {dimension_semantics = [#tpu.dimension_semantics<parallel>], iteration_bounds = array<i64: 1>, scalar_prefetch = 0 : i64, scratch_operands = 0 : i64, tpu.core_type = #tpu.core_type<tc>, window_params = [{transform_indices = @transform_0, window_bounds = array<i64: 2, 16, 8>}, {pipeline_mode = #tpu.pipeline_mode<synchronous>, transform_indices = @transform_1, window_bounds = array<i64: 3, 8, 16>}, {pipeline_mode = #tpu.pipeline_mode<synchronous>, transform_indices = @transform_2, window_bounds = array<i64: 1, 16>}, {pipeline_mode = #tpu.pipeline_mode<synchronous>, transform_indices = @transform_3, window_bounds = array<i64: 16, 128>}, {pipeline_mode = #tpu.pipeline_mode<synchronous>, transform_indices = @transform_4, window_bounds = array<i64: 1, 128>}, {transform_indices = @transform_5, window_bounds = array<i64: 2, 128>}]} {
    %c0 = arith.constant 0 : index
    %c0_0 = arith.constant 0 : index
    %c0_1 = arith.constant 0 : index
    %0 = vector.load %arg1[%c0, %c0_0, %c0_1] : memref<2x16x8xf32, #tpu.memory_space<vmem>>, vector<2x16x8xf32>
    %1 = vector.shape_cast %0 : vector<2x16x8xf32> to vector<32x8xf32>
    %2 = arith.truncf %1 : vector<32x8xf32> to vector<32x8xbf16>
    %c0_2 = arith.constant 0 : index
    %c0_3 = arith.constant 0 : index
    %c0_4 = arith.constant 0 : index
    %3 = vector.load %arg2[%c0_2, %c0_3, %c0_4] : memref<3x8x16xbf16, #tpu.memory_space<vmem>>, vector<1x8x16xbf16>
    %4 = vector.shape_cast %3 : vector<1x8x16xbf16> to vector<8x16xbf16>
    %cst = arith.constant dense<0.000000e+00> : vector<32x16xf32>
    %5 = tpu.matmul %2, %4, %cst {dimension_numbers = #tpu.dot_dimension_numbers<[1], [0], [0], [1], [0, 0, 1, 1], [], []>} : vector<32x8xbf16>, vector<8x16xbf16>, vector<32x16xf32> -> vector<32x16xf32>
    %6 = vector.shape_cast %5 : vector<32x16xf32> to vector<2x16x16xf32>
    %cst_5 = arith.constant 0.000000e+00 : f32
    %7 = vector.broadcast %cst_5 : f32 to vector<2x1x16xf32>
    %8 = vector.extract_strided_slice %6 {offsets = [0, 0, 0], sizes = [2, 15, 16], strides = [1, 1, 1]} : vector<2x16x16xf32> to vector<2x15x16xf32>
    %9 = tpu.concatenate %7, %8 in 1 : vector<2x1x16xf32>, vector<2x15x16xf32> -> vector<2x16x16xf32>
    %c1 = arith.constant 1 : index
    %c0_6 = arith.constant 0 : index
    %c0_7 = arith.constant 0 : index
    %10 = vector.load %arg2[%c1, %c0_6, %c0_7] : memref<3x8x16xbf16, #tpu.memory_space<vmem>>, vector<1x8x16xbf16>
    %11 = vector.shape_cast %10 : vector<1x8x16xbf16> to vector<8x16xbf16>
    %cst_8 = arith.constant dense<0.000000e+00> : vector<32x16xf32>
    %12 = tpu.matmul %2, %11, %cst_8 {dimension_numbers = #tpu.dot_dimension_numbers<[1], [0], [0], [1], [0, 0, 1, 1], [], []>} : vector<32x8xbf16>, vector<8x16xbf16>, vector<32x16xf32> -> vector<32x16xf32>
    %13 = vector.shape_cast %12 : vector<32x16xf32> to vector<2x16x16xf32>
    %14 = arith.addf %9, %13 : vector<2x16x16xf32>
    %c2 = arith.constant 2 : index
    %c0_9 = arith.constant 0 : index
    %c0_10 = arith.constant 0 : index
    %15 = vector.load %arg2[%c2, %c0_9, %c0_10] : memref<3x8x16xbf16, #tpu.memory_space<vmem>>, vector<1x8x16xbf16>
    %16 = vector.shape_cast %15 : vector<1x8x16xbf16> to vector<8x16xbf16>
    %cst_11 = arith.constant dense<0.000000e+00> : vector<32x16xf32>
    %17 = tpu.matmul %2, %16, %cst_11 {dimension_numbers = #tpu.dot_dimension_numbers<[1], [0], [0], [1], [0, 0, 1, 1], [], []>} : vector<32x8xbf16>, vector<8x16xbf16>, vector<32x16xf32> -> vector<32x16xf32>
    %18 = vector.shape_cast %17 : vector<32x16xf32> to vector<2x16x16xf32>
    %19 = vector.extract_strided_slice %18 {offsets = [0, 1, 0], sizes = [2, 15, 16], strides = [1, 1, 1]} : vector<2x16x16xf32> to vector<2x15x16xf32>
    %cst_12 = arith.constant 0.000000e+00 : f32
    %20 = vector.broadcast %cst_12 : f32 to vector<2x1x16xf32>
    %21 = tpu.concatenate %19, %20 in 1 : vector<2x15x16xf32>, vector<2x1x16xf32> -> vector<2x16x16xf32>
    %22 = arith.addf %14, %21 : vector<2x16x16xf32>
    %cst_13 = arith.constant dense<0xFF800000> : vector<2x16xf32>
    %23 = vector.multi_reduction <maximumf>, %22, %cst_13 [1] : vector<2x16x16xf32> to vector<2x16xf32>
    %c0_14 = arith.constant 0 : index
    %c0_15 = arith.constant 0 : index
    %24 = vector.load %arg3[%c0_14, %c0_15] : memref<1x16xf32, #tpu.memory_space<vmem>>, vector<1x16xf32>
    %25 = vector.broadcast %24 : vector<1x16xf32> to vector<2x16xf32>
    %26 = arith.addf %23, %25 : vector<2x16xf32>
    %cst_16 = arith.constant 0.000000e+00 : f32
    %27 = vector.broadcast %cst_16 : f32 to vector<2x16xf32>
    %28 = arith.maximumf %26, %27 : vector<2x16xf32>
    %29 = arith.truncf %28 : vector<2x16xf32> to vector<2x16xbf16>
    %c0_17 = arith.constant 0 : index
    %c0_18 = arith.constant 0 : index
    %30 = vector.load %arg4[%c0_17, %c0_18] : memref<16x128xbf16, #tpu.memory_space<vmem>>, vector<16x128xbf16>
    %cst_19 = arith.constant dense<0.000000e+00> : vector<2x128xf32>
    %31 = tpu.matmul %29, %30, %cst_19 {dimension_numbers = #tpu.dot_dimension_numbers<[1], [0], [0], [1], [0, 0, 1, 1], [], []>} : vector<2x16xbf16>, vector<16x128xbf16>, vector<2x128xf32> -> vector<2x128xf32>
    %c0_20 = arith.constant 0 : index
    %c0_21 = arith.constant 0 : index
    %32 = vector.load %arg5[%c0_20, %c0_21] : memref<1x128xf32, #tpu.memory_space<vmem>>, vector<1x128xf32>
    %33 = vector.broadcast %32 : vector<1x128xf32> to vector<2x128xf32>
    %34 = arith.addf %31, %33 : vector<2x128xf32>
    %c0_22 = arith.constant 0 : index
    %c0_23 = arith.constant 0 : index
    %35 = vector.load %arg6[%c0_22, %c0_23] : memref<2x128xf32, #tpu.memory_space<vmem>>, vector<2x128xf32>
    tpu.vector_store %arg6[%c0_22, %c0_23], %34 {strides = array<i32>} : memref<2x128xf32, #tpu.memory_space<vmem>>, vector<2x128xf32>,
    return
  }
  func.func @transform_0(%arg0: i32) -> (i32, i32, i32) {
    %c0_i32 = arith.constant 0 : i32
    %c0_i32_0 = arith.constant 0 : i32
    %c0_i32_1 = arith.constant 0 : i32
    return %arg0, %c0_i32, %c0_i32_0 : i32, i32, i32
  }
  func.func @transform_1(%arg0: i32) -> (i32, i32, i32) {
    %c0_i32 = arith.constant 0 : i32
    %c0_i32_0 = arith.constant 0 : i32
    %c0_i32_1 = arith.constant 0 : i32
    %c0_i32_2 = arith.constant 0 : i32
    return %c0_i32, %c0_i32_0, %c0_i32_1 : i32, i32, i32
  }
  func.func @transform_2(%arg0: i32) -> (i32, i32) {
    %c0_i32 = arith.constant 0 : i32
    %c0_i32_0 = arith.constant 0 : i32
    %c0_i32_1 = arith.constant 0 : i32
    return %c0_i32, %c0_i32_0 : i32, i32
  }
  func.func @transform_3(%arg0: i32) -> (i32, i32) {
    %c0_i32 = arith.constant 0 : i32
    %c0_i32_0 = arith.constant 0 : i32
    %c0_i32_1 = arith.constant 0 : i32
    return %c0_i32, %c0_i32_0 : i32, i32
  }
  func.func @transform_4(%arg0: i32) -> (i32, i32) {
    %c0_i32 = arith.constant 0 : i32
    %c0_i32_0 = arith.constant 0 : i32
    %c0_i32_1 = arith.constant 0 : i32
    return %c0_i32, %c0_i32_0 : i32, i32
  }
  func.func @transform_5(%arg0: i32) -> (i32, i32) {
    %c0_i32 = arith.constant 0 : i32
    %c0_i32_0 = arith.constant 0 : i32
    return %arg0, %c0_i32 : i32, i32
  }
}

</mosaic_0001>

<llo_original>
// kernel: tpu_custom_call.1
$region0: #{tpu_custom_call.1}
  #allocation0 [shape = 'u32[]', space=smem, size = 0x4, offset = 0x4, fixed_abs, tag = 'smem constant byte address 0x4 - core index']
  #allocation1 [shape = 'u32[144,128]{1,0:T(1,128)}', space=vmem, size = 0x12000, scoped, tag = 'internal scratch']
  %s0 = inlined_call_operand.vmem [shape: f32[2,16,8], index: 0, kind: input, shape index: {}]
  %s1 = inlined_call_operand.vmem [shape: bf16[3,8,16], index: 1, kind: input, shape index: {}]
  %s2 = inlined_call_operand.vmem [shape: f32[1,16], index: 2, kind: input, shape index: {}]
  %s3 = inlined_call_operand.vmem [shape: bf16[16,128], index: 3, kind: input, shape index: {}]
  %s4 = inlined_call_operand.vmem [shape: f32[1,128], index: 4, kind: input, shape index: {}]
  %s5 = inlined_call_operand.hbm [shape: f32[2,128], index: 5, kind: output, shape index: {}]
  %s6 = sld [smem:[#allocation0]]
  $region30: #{tpu_custom_call.1} parent=0
    _
  %s8 = ssub.s32 1, %s6
  %s9 = scalar_select 0, %s8, %s6
  $region1: #{tpu_custom_call.1} parent=0
    #allocation2 [shape = 'u8[1024]{0}', space=vmem, size = 0x400, scoped, tag = 'output window, operand 0, single buffered']
    #allocation3 [shape = 's32[1]{0}', space=sflag, size = 0x4, scoped, tag = 'scoped memory for tpu_custom_call.1']
    %10 = vsyncpa [#allocation3], 0
    // Predicated region
    $region2: #{tpu_custom_call.1} parent=1 // pred_check
      _
    $region3: #{tpu_custom_call.1} parent=1 // pred_check_branch
      %12 = sbr.rel (0) target = $region5
    $region4: #{tpu_custom_call.1} parent=1 // pred_region
      _
    $region5: #{tpu_custom_call.1} parent=1 // pred_fallthru
      _
    // Predicated region
    $region6: #{tpu_custom_call.1} parent=1 // pred_check
      _
    $region7: #{tpu_custom_call.1} parent=1 // pred_check_branch
      %14 = sbr.rel (0) target = $region9
    $region8: #{tpu_custom_call.1} parent=1 // pred_region
      _
    $region9: #{tpu_custom_call.1} parent=1 // pred_fallthru
      _
    // Predicated region
    $region10: #{tpu_custom_call.1} parent=1 // pred_check
      _
    $region11: #{tpu_custom_call.1} parent=1 // pred_check_branch
      %16 = sbr.rel (0) target = $region13
    $region12: #{tpu_custom_call.1} parent=1 // pred_region
      _
    $region13: #{tpu_custom_call.1} parent=1 // pred_fallthru
      _
    // Predicated region
    $region14: #{tpu_custom_call.1} parent=1 // pred_check
      _
    $region15: #{tpu_custom_call.1} parent=1 // pred_check_branch
      %18 = sbr.rel (0) target = $region17
    $region16: #{tpu_custom_call.1} parent=1 // pred_region
      _
    $region17: #{tpu_custom_call.1} parent=1 // pred_fallthru
      _
    // Predicated region
    $region18: #{tpu_custom_call.1} parent=1 // pred_check
      _
    $region19: #{tpu_custom_call.1} parent=1 // pred_check_branch
      %20 = sbr.rel (0) target = $region21
    $region20: #{tpu_custom_call.1} parent=1 // pred_region
      _
    $region21: #{tpu_custom_call.1} parent=1 // pred_fallthru
      _
    %v22 = vld [vmem:[%s0] sm:$0xff]
    %v23 = vld [vmem:[%s0 + $0x8] sm:$0xff]
    %v24 = vld [vmem:[%s0 + $0x10] sm:$0xff]
    %v25 = vld [vmem:[%s0 + $0x18] sm:$0xff]
    %v26 = vpack.c.bf16 %v23, %v22
    %v27 = vpack.c.bf16 %v25, %v24
    %v28 = vld [vmem:[%s1] sm:$0xf]
    %vm29 = vcmask 64512
    %v31 = vsel %vm29, %v26, 0
    %v34 = vsel %vm29, %v27, 0
    %vm36 = vcmask 1043456
    %v38 = vsel %vm36, %v28, 0
    %40 = vmatprep.subr.bf16.mxu0 0
    %41 = vmatpush1.bf16.msra.mxu0 0
    %42 = vmatprep.subr.bf16.mxu0 0
    %43 = vmatpush1.bf16.msra.mxu0 0
    %44 = vmatprep.subr.bf16.mxu0 0
    %45 = vmatpush1.bf16.msra.mxu0 0
    %46 = vmatprep.subr.bf16.mxu0 0
    %47 = vmatpush1.bf16.msra.mxu0 0
    %48 = vmatprep.subr.bf16.mxu0 0
    %49 = vmatpush1.bf16.msra.mxu0 0
    %50 = vmatprep.subr.bf16.mxu0 0
    %51 = vmatpush1.bf16.msra.mxu0 0
    %52 = vmatprep.subr.bf16.mxu0 0
    %53 = vmatpush1.bf16.msra.mxu0 0
    %54 = vmatprep.subr.bf16.mxu0 0
    %55 = vmatpush1.bf16.msra.mxu0 %v38
    %56 = vmatprep.subr.bf16.mxu0 0
    %57 = vmatpush2.bf16.msra.mxu0 0
    %58 = vmatprep.subr.bf16.mxu0 0
    %59 = vmatpush2.bf16.msra.mxu0 0
    %60 = vmatprep.subr.bf16.mxu0 0
    %61 = vmatpush2.bf16.msra.mxu0 0
    %62 = vmatprep.subr.bf16.mxu0 0
    %63 = vmatpush2.bf16.msra.mxu0 0
    %64 = vmatprep.subr.bf16.mxu0 0
    %65 = vmatpush2.bf16.msra.mxu0 0
    %66 = vmatprep.subr.bf16.mxu0 0
    %67 = vmatpush2.bf16.msra.mxu0 0
    %68 = vmatprep.subr.bf16.mxu0 0
    %69 = vmatpush2.bf16.msra.mxu0 0
    %70 = vmatprep.subr.bf16.mxu0 0
    %71 = vmatpush2.bf16.msra.mxu0 0
    %72 = vmatprep.mubr.bf16.mxu0 0
    %73 = vmatmul.mubr.bf16.gmra.mxu0 %v31
    %v74 = vpop.f32.mrf.mxu0
    %v75 = vadd.f32 0.0, %v74
    %v76 = vpop.f32.mrf.mxu0
    %v77 = vpop.f32.mrf.mxu0
    %v78 = vadd.f32 0.0, %v77
    %v79 = vpop.f32.mrf.mxu0
    %80 = vmatprep.mubr.bf16.mxu0 0
    %81 = vmatmul.mubr.bf16.gmra.mxu0 %v34
    %v82 = vpop.f32.mrf.mxu0
    %v83 = vadd.f32 0.0, %v82
    %v84 = vpop.f32.mrf.mxu0
    %v85 = vpop.f32.mrf.mxu0
    %v86 = vadd.f32 0.0, %v85
    %v87 = vpop.f32.mrf.mxu0
    %88 = vdwg.mxu0
    %vm93 = vcmask 1040384
    %v94 = vrot.slane %v75, 7
    %v95 = vrot.slane %v78, 7
    %v96 = vsel %vm93, %v94, %v95
    %v97 = vrot.slane %v83, 7
    %v98 = vrot.slane %v86, 7
    %v99 = vsel %vm93, %v97, %v98
    %v104 = vsel %vm93, 0.0, %v94
    %v105 = vsel %vm93, 0.0, %v97
    %s106 = scalar_lea.vmem %s1, 4
    %v107 = vld [vmem:[%s106] sm:$0xf]
    %v109 = vsel %vm36, %v107, 0
    %111 = vmatprep.subr.bf16.mxu0 0
    %112 = vmatpush1.bf16.msra.mxu0 0
    %113 = vmatprep.subr.bf16.mxu0 0
    %114 = vmatpush1.bf16.msra.mxu0 0
    %115 = vmatprep.subr.bf16.mxu0 0
    %116 = vmatpush1.bf16.msra.mxu0 0
    %117 = vmatprep.subr.bf16.mxu0 0
    %118 = vmatpush1.bf16.msra.mxu0 0
    %119 = vmatprep.subr.bf16.mxu0 0
    %120 = vmatpush1.bf16.msra.mxu0 0
    %121 = vmatprep.subr.bf16.mxu0 0
    %122 = vmatpush1.bf16.msra.mxu0 0
    %123 = vmatprep.subr.bf16.mxu0 0
    %124 = vmatpush1.bf16.msra.mxu0 0
    %125 = vmatprep.subr.bf16.mxu0 0
    %126 = vmatpush1.bf16.msra.mxu0 %v109
    %127 = vmatprep.subr.bf16.mxu0 0
    %128 = vmatpush2.bf16.msra.mxu0 0
    %129 = vmatprep.subr.bf16.mxu0 0
    %130 = vmatpush2.bf16.msra.mxu0 0
    %131 = vmatprep.subr.bf16.mxu0 0
    %132 = vmatpush2.bf16.msra.mxu0 0
    %133 = vmatprep.subr.bf16.mxu0 0
    %134 = vmatpush2.bf16.msra.mxu0 0
    %135 = vmatprep.subr.bf16.mxu0 0
    %136 = vmatpush2.bf16.msra.mxu0 0
    %137 = vmatprep.subr.bf16.mxu0 0
    %138 = vmatpush2.bf16.msra.mxu0 0
    %139 = vmatprep.subr.bf16.mxu0 0
    %140 = vmatpush2.bf16.msra.mxu0 0
    %141 = vmatprep.subr.bf16.mxu0 0
    %142 = vmatpush2.bf16.msra.mxu0 0
    %143 = vmatprep.mubr.bf16.mxu0 0
    %144 = vmatmul.mubr.bf16.gmra.mxu0 %v31
    %v145 = vpop.f32.mrf.mxu0
    %v146 = vadd.f32 0.0, %v145
    %v147 = vpop.f32.mrf.mxu0
    %v148 = vpop.f32.mrf.mxu0
    %v149 = vadd.f32 0.0, %v148
    %v150 = vpop.f32.mrf.mxu0
    %151 = vmatprep.mubr.bf16.mxu0 0
    %152 = vmatmul.mubr.bf16.gmra.mxu0 %v34
    %v153 = vpop.f32.mrf.mxu0
    %v154 = vadd.f32 0.0, %v153
    %v155 = vpop.f32.mrf.mxu0
    %v156 = vpop.f32.mrf.mxu0
    %v157 = vadd.f32 0.0, %v156
    %v158 = vpop.f32.mrf.mxu0
    %159 = vdwg.mxu0
    %v160 = vadd.f32 %v104, %v146
    %v161 = vadd.f32 %v96, %v149
    %v162 = vadd.f32 %v105, %v154
    %v163 = vadd.f32 %v99, %v157
    %s164 = scalar_lea.vmem %s1, 8
    %v165 = vld [vmem:[%s164] sm:$0xf]
    %v167 = vsel %vm36, %v165, 0
    %169 = vmatprep.subr.bf16.mxu0 0
    %170 = vmatpush1.bf16.msra.mxu0 0
    %171 = vmatprep.subr.bf16.mxu0 0
    %172 = vmatpush1.bf16.msra.mxu0 0
    %173 = vmatprep.subr.bf16.mxu0 0
    %174 = vmatpush1.bf16.msra.mxu0 0
    %175 = vmatprep.subr.bf16.mxu0 0
    %176 = vmatpush1.bf16.msra.mxu0 0
    %177 = vmatprep.subr.bf16.mxu0 0
    %178 = vmatpush1.bf16.msra.mxu0 0
    %179 = vmatprep.subr.bf16.mxu0 0
    %180 = vmatpush1.bf16.msra.mxu0 0
    %181 = vmatprep.subr.bf16.mxu0 0
    %182 = vmatpush1.bf16.msra.mxu0 0
    %183 = vmatprep.subr.bf16.mxu0 0
    %184 = vmatpush1.bf16.msra.mxu0 %v167
    %185 = vmatprep.subr.bf16.mxu0 0
    %186 = vmatpush2.bf16.msra.mxu0 0
    %187 = vmatprep.subr.bf16.mxu0 0
    %188 = vmatpush2.bf16.msra.mxu0 0
    %189 = vmatprep.subr.bf16.mxu0 0
    %190 = vmatpush2.bf16.msra.mxu0 0
    %191 = vmatprep.subr.bf16.mxu0 0
    %192 = vmatpush2.bf16.msra.mxu0 0
    %193 = vmatprep.subr.bf16.mxu0 0
    %194 = vmatpush2.bf16.msra.mxu0 0
    %195 = vmatprep.subr.bf16.mxu0 0
    %196 = vmatpush2.bf16.msra.mxu0 0
    %197 = vmatprep.subr.bf16.mxu0 0
    %198 = vmatpush2.bf16.msra.mxu0 0
    %199 = vmatprep.subr.bf16.mxu0 0
    %200 = vmatpush2.bf16.msra.mxu0 0
    %201 = vmatprep.mubr.bf16.mxu0 0
    %202 = vmatmul.mubr.bf16.gmra.mxu0 %v31
    %v203 = vpop.f32.mrf.mxu0
    %v204 = vadd.f32 0.0, %v203
    %v205 = vpop.f32.mrf.mxu0
    %v206 = vpop.f32.mrf.mxu0
    %v207 = vadd.f32 0.0, %v206
    %v208 = vpop.f32.mrf.mxu0
    %209 = vmatprep.mubr.bf16.mxu0 0
    %210 = vmatmul.mubr.bf16.gmra.mxu0 %v34
    %v211 = vpop.f32.mrf.mxu0
    %v212 = vadd.f32 0.0, %v211
    %v213 = vpop.f32.mrf.mxu0
    %v214 = vpop.f32.mrf.mxu0
    %v215 = vadd.f32 0.0, %v214
    %v216 = vpop.f32.mrf.mxu0
    %217 = vdwg.mxu0
    %vm222 = vcmask 1046528
    %v223 = vrot.slane %v204, 1
    %v224 = vrot.slane %v207, 1
    %v225 = vsel %vm222, %v223, %v224
    %v226 = vrot.slane %v212, 1
    %v227 = vrot.slane %v215, 1
    %v228 = vsel %vm222, %v226, %v227
    %v233 = vsel %vm222, %v224, 0.0
    %v234 = vsel %vm222, %v227, 0.0
    %v235 = vadd.f32 %v160, %v225
    %v236 = vadd.f32 %v161, %v233
    %v237 = vadd.f32 %v162, %v228
    %v238 = vadd.f32 %v163, %v234
    %vm239 = vcmask 130048
    %v240 = vsel %vm239, %v235, -inf
    %v241 = vsel %vm239, %v236, -inf
    %v242 = vmax.f32 %v240, %v241
    %v243 = vrot.slane %v242, 4
    %v244 = vmax.f32 %v242, %v243
    %v245 = vrot.slane %v244, 2
    %v246 = vmax.f32 %v244, %v245
    %v247 = vrot.slane %v246, 1
    %v248 = vmax.f32 %v246, %v247
    %v249 = vsel %vm239, %v237, -inf
    %v250 = vsel %vm239, %v238, -inf
    %v251 = vmax.f32 %v249, %v250
    %v252 = vrot.slane %v251, 4
    %v253 = vmax.f32 %v251, %v252
    %v254 = vrot.slane %v253, 2
    %v255 = vmax.f32 %v253, %v254
    %v256 = vrot.slane %v255, 1
    %v257 = vmax.f32 %v255, %v256
    %v258 = vld [vmem:[%s2] sm:$0x1]
    %v260 = vlaneseq
    %v261 = vshrl.u32 %v260, 7
    %v262 = vsub.s32 0, %v261
    %v263 = vrot.slane %v258, %v262
    %v265 = vadd.f32 %v248, %v263
    %v266 = vadd.f32 %v257, %v263
    %v267 = vmax.f32 %v265, 0.0
    %v268 = vmax.f32 %v266, 0.0
    %v269 = vpack.c.bf16 %v267, %v267
    %v270 = vpack.c.bf16 %v268, %v268
    %v271 = vld [vmem:[%s3] sm:$0xf]
    %v272 = vld [vmem:[%s3 + $0x4] sm:$0xf]
    %v273 = vld [vmem:[%s4] sm:$0x1]
    %v275 = vlaneseq
    %v276 = vshrl.u32 %v275, 7
    %v277 = vsub.s32 0, %v276
    %v278 = vrot.slane %v273, %v277
    %v282 = vunpack.c.l.b16 %v269
    %v283 = vunpack.c.l.b16 %v270
    %v284 = vrot.slane %v283, 7
    %vm285 = vcmask 1041409
    %v286 = vsel %vm285, %v284, %v282
    %v287 = vpack.c.b16 %v286, %v286
    %v290 = vunpack.c.l.b16 %v271
    %v291 = vunpack.c.l.b16 %v272
    %v292 = vpack.c.b16 %v291, %v290
    %v295 = vsel %vm239, %v287, 0
    %297 = vmatprep.subr.bf16.mxu0 0
    %298 = vmatpush1.bf16.msra.mxu0 0
    %299 = vmatprep.subr.bf16.mxu0 0
    %300 = vmatpush1.bf16.msra.mxu0 0
    %301 = vmatprep.subr.bf16.mxu0 0
    %302 = vmatpush1.bf16.msra.mxu0 0
    %303 = vmatprep.subr.bf16.mxu0 0
    %304 = vmatpush1.bf16.msra.mxu0 0
    %305 = vmatprep.subr.bf16.mxu0 0
    %306 = vmatpush1.bf16.msra.mxu0 0
    %307 = vmatprep.subr.bf16.mxu0 0
    %308 = vmatpush1.bf16.msra.mxu0 0
    %309 = vmatprep.subr.bf16.mxu0 0
    %310 = vmatpush1.bf16.msra.mxu0 0
    %311 = vmatprep.subr.bf16.mxu0 0
    %312 = vmatpush1.bf16.msra.mxu0 %v292
    %313 = vmatprep.subr.bf16.mxu0 0
    %314 = vmatpush2.bf16.msra.mxu0 0
    %315 = vmatprep.subr.bf16.mxu0 0
    %316 = vmatpush2.bf16.msra.mxu0 0
    %317 = vmatprep.subr.bf16.mxu0 0
    %318 = vmatpush2.bf16.msra.mxu0 0
    %319 = vmatprep.subr.bf16.mxu0 0
    %320 = vmatpush2.bf16.msra.mxu0 0
    %321 = vmatprep.subr.bf16.mxu0 0
    %322 = vmatpush2.bf16.msra.mxu0 0
    %323 = vmatprep.subr.bf16.mxu0 0
    %324 = vmatpush2.bf16.msra.mxu0 0
    %325 = vmatprep.subr.bf16.mxu0 0
    %326 = vmatpush2.bf16.msra.mxu0 0
    %327 = vmatprep.subr.bf16.mxu0 0
    %328 = vmatpush2.bf16.msra.mxu0 0
    %329 = vmatprep.mubr.bf16.mxu0 0
    %330 = vmatmul.mubr.bf16.gmra.mxu0 %v295
    %v331 = vpop.f32.mrf.mxu0
    %v332 = vadd.f32 %v278, %v331
    %v333 = vpop.f32.mrf.mxu0
    %v334 = vpop.f32.mrf.mxu0
    %v335 = vpop.f32.mrf.mxu0
    %336 = vdwg.mxu0
    %337 = vst [vmem:[#allocation2] sm:$0x3] %v332
    // Predicated region
    $region22: #{tpu_custom_call.1} parent=1 // pred_check
      _
    $region23: #{tpu_custom_call.1} parent=1 // pred_check_branch
      %339 = sbr.rel (0) target = $region25
    $region24: #{tpu_custom_call.1} parent=1 // pred_region
      %s341 = ssub.s32 32, 32
      %342 = vsyncadd [#allocation3], %s341
      %s344 = sshll.u32 [#allocation2], 4
      %s345 = int_to_ptr.vmem [resolvable:$true] %s344
      %347 = dma.vmem_to_hbm [thread:$0]  %s345, 32, %s5, [#allocation3]
    $region25: #{tpu_custom_call.1} parent=1 // pred_fallthru
      _
    // Predicated region
    $region26: #{tpu_custom_call.1} parent=1 // pred_check
      _
    $region27: #{tpu_custom_call.1} parent=1 // pred_check_branch
      %349 = sbr.rel (0) target = $region29
    $region28: #{tpu_custom_call.1} parent=1 // pred_region
      %350 = dma.done [#allocation3], 32
    $region29: #{tpu_custom_call.1} parent=1 // pred_fallthru
      _
    %351 = vsyncpa [#allocation3], 1

</llo_original>
